<compile_context>
chip_gen: v5e
topology: v5e:2x2
jax: 0.10.0
libtpu: 0.0.40
codegen_flags: <defaults>
</compile_context>

<pallas_src>
import functools
import math

import jax
import jax.numpy as jnp
from jax import lax
from jax.experimental import pallas as pl
from jax.experimental.pallas import tpu as pltpu

_LANES = 128
_SUBLANES = 8
_VMEM_BLOCK_BUDGET = 32 * 1024 * 1024   # 2x input blocks + f32 working temps
_VMEM_LIMIT = 48 * 1024 * 1024          # scoped VMEM limit (safe on v7x 64 MiB)


def _round_up(x, m):
    return (x + m - 1) // m * m


def _max_entropy_kernel(logits_ref, out_ref, *, n_classes, batch, block_batch):
    """One batch tile: per-row loss = lse(x) - sum(x)/C - log(C); tile partial sum."""
    x = logits_ref[...]                                        # (bb, C), native dtype
    # Mask rows past the (static) batch size: the last grid step may map to a
    # partial block whose out-of-bounds contents are unspecified.  Zeroed rows
    # contribute exactly 0 to the loss (lse = log(C) cancels the -log(C)).
    row = pl.program_id(0) * block_batch + lax.broadcasted_iota(
        jnp.int32, (block_batch, 1), 0)
    x = jnp.where(row < batch, x, jnp.zeros_like(x))
    # Numerically stable row-wise logsumexp.  Casts sit inside the elementwise
    # chains so bf16 inputs never materialize a named full-tile f32 copy.
    m = jnp.max(x, axis=-1, keepdims=True).astype(jnp.float32)            # (bb, 1)
    s = jnp.sum(jnp.exp(x.astype(jnp.float32) - m), axis=-1, keepdims=True)
    lse = jnp.log(s) + m                                                  # (bb, 1)
    rowsum = jnp.sum(x.astype(jnp.float32), axis=-1, keepdims=True)       # (bb, 1)
    # sum_c -(log_softmax(x)[c] + log C) / C  ==  lse - rowsum/C - log C
    per_row = lse - rowsum * (1.0 / n_classes) - math.log(n_classes)
    tile_sum = jnp.sum(per_row)
    # Lane-dense (1, 128) partial row; the wrapper reads lane 0 only.
    out_ref[...] = jnp.full(out_ref.shape, tile_sum, dtype=jnp.float32)


def _pick_block_batch(batch, n_classes, itemsize):
    # Lane-padded VMEM footprint per row: the input block is double-buffered
    # and the logsumexp keeps ~2 f32 row-width temporaries live.
    padded_c = _round_up(n_classes, _LANES)
    per_row = 2 * padded_c * itemsize + 2 * padded_c * 4
    rows = _VMEM_BLOCK_BUDGET // per_row
    rows = max(_SUBLANES, (rows // _SUBLANES) * _SUBLANES)
    # No point tiling beyond the (sublane-rounded) batch itself.
    rows = min(rows, _round_up(max(batch, 1), _SUBLANES))
    return rows


def max_entropy_loss(logits, reduction="mean"):
    """Pallas implementation of MaxEntropyLoss.forward (2D logits [B, C])."""
    batch, n_classes = logits.shape
    itemsize = logits.dtype.itemsize

    if batch <= _SUBLANES:
        bb = batch                      # single full-extent block (no grid tiling)
    else:
        bb = _pick_block_batch(batch, n_classes, itemsize)
        # Guarantee >= 2 tiles so the 'parallel' grid axis can shard across both
        # TensorCores on v7x (a single-tile grid leaves one core idle).
        if pl.cdiv(batch, bb) == 1:
            bb = max(_SUBLANES, _round_up(pl.cdiv(batch, 2), _SUBLANES))
    num_tiles = pl.cdiv(batch, bb)

    kernel = functools.partial(
        _max_entropy_kernel, n_classes=n_classes, batch=batch, block_batch=bb)

    partials = pl.pallas_call(
        kernel,
        out_shape=jax.ShapeDtypeStruct((num_tiles, _LANES), jnp.float32),
        grid=(num_tiles,),
        in_specs=[pl.BlockSpec((bb, n_classes), lambda i: (i, 0))],
        out_specs=pl.BlockSpec((1, _LANES), lambda i: (i, 0)),
        compiler_params=pltpu.CompilerParams(
            dimension_semantics=("parallel",),      # independent tiles (megacore OK)
            vmem_limit_bytes=_VMEM_LIMIT,
        ),
        cost_estimate=pl.CostEstimate(
            flops=3 * batch * n_classes,
            transcendentals=batch * n_classes,
            bytes_accessed=batch * n_classes * itemsize,
        ),
    )(logits)

    total = jnp.sum(partials[:, 0])
    if reduction == "mean":
        return total / jnp.float32(batch)
    return total


def _reference(logits, reduction="mean"):
    b, c = logits.shape
    loss = -(jax.nn.log_softmax(logits.astype(jnp.float32), axis=1)
             + math.log(c)) * (1.0 / c)
    loss = loss.sum(-1)
    return loss.mean() if reduction == "mean" else loss.sum()


if __name__ == "__main__":
    key = jax.random.PRNGKey(0)

    # Case 1: batch equal to one sublane group, f32.
    logits1 = jax.random.normal(key, (8, 32), dtype=jnp.float32)
    o1m = jax.block_until_ready(max_entropy_loss(logits1, reduction="mean"))
    o1s = jax.block_until_ready(max_entropy_loss(logits1, reduction="sum"))
    assert jnp.allclose(o1m, _reference(logits1, "mean"), rtol=1e-5, atol=1e-5)
    assert jnp.allclose(o1s, _reference(logits1, "sum"), rtol=1e-5, atol=1e-5)

    # Case 2: ragged batch (exercises in-kernel masking + forced 2-tile grid).
    logits2 = jax.random.normal(jax.random.PRNGKey(1), (12, 32), dtype=jnp.float32)
    o2m = jax.block_until_ready(max_entropy_loss(logits2, reduction="mean"))
    o2s = jax.block_until_ready(max_entropy_loss(logits2, reduction="sum"))
    assert jnp.allclose(o2m, _reference(logits2, "mean"), rtol=1e-5, atol=1e-5)
    assert jnp.allclose(o2s, _reference(logits2, "sum"), rtol=1e-5, atol=1e-5)

    # Case 3: tiny batch (< 8 rows, full-extent block) and bf16 input path.
    logits3 = jax.random.normal(jax.random.PRNGKey(2), (2, 48), dtype=jnp.bfloat16)
    o3m = jax.block_until_ready(max_entropy_loss(logits3, reduction="mean"))
    assert jnp.allclose(o3m, _reference(logits3, "mean"), rtol=1e-3, atol=1e-4)

    print("KERNEL_OK")
</pallas_src>

<mosaic_0001>
module attributes {stable_mosaic.version = 11 : i64} {
  func.func @_max_entropy_kernel(%arg0: i32, %arg1: memref<8x32xf32, #tpu.memory_space<vmem>>, %arg2: memref<1x128xf32, #tpu.memory_space<vmem>>) attributes {dimension_semantics = [#tpu.dimension_semantics<parallel>], iteration_bounds = array<i64: 1>, scalar_prefetch = 0 : i64, scratch_operands = 0 : i64, tpu.core_type = #tpu.core_type<tc>, window_params = [{transform_indices = @transform_0, window_bounds = array<i64: 8, 32>}, {transform_indices = @transform_1, window_bounds = array<i64: 1, 128>}]} {
    %c0 = arith.constant 0 : index
    %c0_0 = arith.constant 0 : index
    %0 = vector.load %arg1[%c0, %c0_0] : memref<8x32xf32, #tpu.memory_space<vmem>>, vector<8x32xf32>
    %c8_i32 = arith.constant 8 : i32
    %1 = arith.muli %arg0, %c8_i32 : i32
    %2 = tpu.iota {dimensions = array<i32: 0>} : vector<8x1xi32>
    %3 = vector.broadcast %1 : i32 to vector<8x1xi32>
    %4 = arith.addi %3, %2 : vector<8x1xi32>
    %c8_i32_1 = arith.constant 8 : i32
    %5 = vector.broadcast %c8_i32_1 : i32 to vector<8x1xi32>
    %6 = arith.cmpi slt, %4, %5 : vector<8x1xi32>
    %cst = arith.constant 0.000000e+00 : f32
    %7 = vector.broadcast %cst : f32 to vector<8x32xf32>
    %8 = vector.shape_cast %6 : vector<8x1xi1> to vector<8x1xi1>
    %9 = vector.broadcast %8 : vector<8x1xi1> to vector<8x32xi1>
    %10 = arith.select %9, %0, %7 : vector<8x32xi1>, vector<8x32xf32>
    %cst_2 = arith.constant dense<0xFF800000> : vector<8xf32>
    %11 = vector.multi_reduction <maximumf>, %10, %cst_2 [1] : vector<8x32xf32> to vector<8xf32>
    %12 = vector.shape_cast %11 : vector<8xf32> to vector<8x1xf32>
    %13 = vector.broadcast %12 : vector<8x1xf32> to vector<8x32xf32>
    %14 = arith.subf %10, %13 : vector<8x32xf32>
    %15 = math.exp %14 : vector<8x32xf32>
    %cst_3 = arith.constant dense<0.000000e+00> : vector<8xf32>
    %16 = vector.multi_reduction <add>, %15, %cst_3 [1] : vector<8x32xf32> to vector<8xf32>
    %17 = vector.shape_cast %16 : vector<8xf32> to vector<8x1xf32>
    %18 = math.log %17 : vector<8x1xf32>
    %19 = arith.addf %18, %12 : vector<8x1xf32>
    %cst_4 = arith.constant dense<0.000000e+00> : vector<8xf32>
    %20 = vector.multi_reduction <add>, %10, %cst_4 [1] : vector<8x32xf32> to vector<8xf32>
    %21 = vector.shape_cast %20 : vector<8xf32> to vector<8x1xf32>
    %cst_5 = arith.constant 3.125000e-02 : f32
    %22 = vector.broadcast %cst_5 : f32 to vector<8x1xf32>
    %23 = arith.mulf %21, %22 : vector<8x1xf32>
    %24 = arith.subf %19, %23 : vector<8x1xf32>
    %cst_6 = arith.constant 3.46573591 : f32
    %25 = vector.broadcast %cst_6 : f32 to vector<8x1xf32>
    %26 = arith.subf %24, %25 : vector<8x1xf32>
    %27 = vector.shape_cast %26 : vector<8x1xf32> to vector<1x8x1xf32>
    %cst_7 = arith.constant dense<0.000000e+00> : vector<1xf32>
    %28 = vector.multi_reduction <add>, %27, %cst_7 [1, 2] : vector<1x8x1xf32> to vector<1xf32>
    %29 = vector.shape_cast %28 : vector<1xf32> to vector<1x1x1xf32>
    %30 = vector.extract %29[0, 0, 0] : f32 from vector<1x1x1xf32>
    %31 = vector.broadcast %30 : f32 to vector<1x128xf32>
    %c0_8 = arith.constant 0 : index
    %c0_9 = arith.constant 0 : index
    %32 = vector.load %arg2[%c0_8, %c0_9] : memref<1x128xf32, #tpu.memory_space<vmem>>, vector<1x128xf32>
    tpu.vector_store %arg2[%c0_8, %c0_9], %31 {strides = array<i32>} : memref<1x128xf32, #tpu.memory_space<vmem>>, vector<1x128xf32>,
    return
  }
  func.func @transform_0(%arg0: i32) -> (i32, i32) {
    %c0_i32 = arith.constant 0 : i32
    %c0_i32_0 = arith.constant 0 : i32
    return %arg0, %c0_i32 : i32, i32
  }
  func.func @transform_1(%arg0: i32) -> (i32, i32) {
    %c0_i32 = arith.constant 0 : i32
    %c0_i32_0 = arith.constant 0 : i32
    return %arg0, %c0_i32 : i32, i32
  }
}

</mosaic_0001>

<llo_original>
// kernel: tpu_custom_call.1
$region0: #{tpu_custom_call.1}
  #allocation0 [shape = 'u32[]', space=smem, size = 0x4, offset = 0x4, fixed_abs, tag = 'smem constant byte address 0x4 - core index']
  #allocation1 [shape = 'u32[72,128]{1,0:T(1,128)}', space=vmem, size = 0x9000, scoped, tag = 'internal scratch']
  %s0 = inlined_call_operand.hbm [shape: f32[8,32], index: 0, kind: input, shape index: {}]
  %s1 = inlined_call_operand.hbm [shape: f32[1,128], index: 1, kind: output, shape index: {}]
  %s2 = sld [smem:[#allocation0]]
  $region18: #{tpu_custom_call.1} parent=0
    _
  %s4 = ssub.s32 1, %s2
  %s5 = scalar_select 0, %s4, %s2
  $region1: #{tpu_custom_call.1} parent=0
    #allocation2 [shape = 'u8[4096]{0}', space=vmem, size = 0x1000, scoped, tag = 'input window, operand 0, single buffered']
    #allocation3 [shape = 's32[1]{0}', space=sflag, size = 0x4, scoped, tag = 'scoped memory for tpu_custom_call.1']
    #allocation4 [shape = 's32[1]{0}', space=sflag, size = 0x4, scoped, tag = 'scoped memory for tpu_custom_call.1']
    #allocation5 [shape = 'u8[512]{0}', space=vmem, size = 0x400, scoped, tag = 'output window, operand 0, single buffered']
    %6 = vsyncpa [#allocation3], 0
    %7 = vsyncpa [#allocation4], 0
    // Predicated region
    $region2: #{tpu_custom_call.1} parent=1 // pred_check
      _
    $region3: #{tpu_custom_call.1} parent=1 // pred_check_branch
      %9 = sbr.rel (0) target = $region5
    $region4: #{tpu_custom_call.1} parent=1 // pred_region
      %11 = vsyncadd [#allocation3], 0
      %s13 = sshll.u32 %s0, 4
      %s14 = int_to_ptr.hbm [resolvable:$true] %s13
      %s15 = sshll.u32 [#allocation2], 4
      %s16 = int_to_ptr.vmem [resolvable:$true] %s15
      %18 = dma.hbm_to_vmem [thread:$0]  %s14, 128, %s16, [#allocation3]
    $region5: #{tpu_custom_call.1} parent=1 // pred_fallthru
      _
    // Predicated region
    $region6: #{tpu_custom_call.1} parent=1 // pred_check
      _
    $region7: #{tpu_custom_call.1} parent=1 // pred_check_branch
      %20 = sbr.rel (0) target = $region9
    $region8: #{tpu_custom_call.1} parent=1 // pred_region
      %22 = dma.done [#allocation3], 128
    $region9: #{tpu_custom_call.1} parent=1 // pred_fallthru
      _
    %v23 = vld [vmem:[#allocation2] sm:$0xff]
    %s24 = smul.u32 0, 8
    %v25 = vlaneseq
    %v26 = vshrl.u32 %v25, 7
    %v27 = vstv %s24
    %v28 = vadd.s32 %v27, %v26
    %vm29 = vcmp.lt.s32.totalorder %v28, 8
    %v30 = vsel %vm29, 1, 0
    %vm31 = vcmp.eq.s32.totalorder %v30, 1
    %v32 = vsel %vm31, %v23, 0.0
    %vm33 = vcmask 261120
    %v34 = vsel %vm33, %v32, -inf
    %35 = vmax.xlane.f32.xlu0 %v34
    %v36 = vpop.xlane.xlu0 %35
    %v37 = vsub.f32 %v32, %v36
    %v38 = vmul.f32 %v37, 1.442695
    %v39 = vpow.pop %v38
    %v40 = vsel %vm33, %v39, 0.0
    %41 = vadd.xlane.f32.xlu0 %v40
    %v42 = vpop.xlane.xlu0 %41
    %v43 = vlog2.pop %v42
    %v44 = vmul.f32 %v43, 0.6931472
    %v45 = vadd.f32 %v44, %v36
    %v46 = vsel %vm33, %v32, 0.0
    %47 = vadd.xlane.f32.xlu0 %v46
    %v48 = vpop.xlane.xlu0 %47
    %v49 = vmul.f32 %v48, 0.03125
    %v50 = vsub.f32 %v45, %v49
    %v51 = vsub.f32 %v50, 3.465736
    %vm52 = vcmask 7168
    %v53 = vsel %vm52, %v51, 0.0
    %54 = vadd.xlane.f32.xlu0 %v53
    %v55 = vpop.xlane.xlu0 %54
    %v56 = vrot.slane %v55, 4
    %v57 = vadd.f32 %v55, %v56
    %v58 = vrot.slane %v57, 2
    %v59 = vadd.f32 %v57, %v58
    %v60 = vrot.slane %v59, 1
    %v61 = vadd.f32 %v59, %v60
    %s62 = vtos %v61
    %v63 = vstv %s62
    %64 = vst [vmem:[#allocation5] sm:$0x1] %v63
    // Predicated region
    $region10: #{tpu_custom_call.1} parent=1 // pred_check
      _
    $region11: #{tpu_custom_call.1} parent=1 // pred_check_branch
      %66 = sbr.rel (0) target = $region13
    $region12: #{tpu_custom_call.1} parent=1 // pred_region
      %68 = vsyncadd [#allocation4], 0
      %s70 = sshll.u32 [#allocation5], 4
      %s71 = int_to_ptr.vmem [resolvable:$true] %s70
      %s72 = sshll.u32 %s1, 4
      %s73 = int_to_ptr.hbm [resolvable:$true] %s72
      %75 = dma.vmem_to_hbm [thread:$0]  %s71, 16, %s73, [#allocation4]
    $region13: #{tpu_custom_call.1} parent=1 // pred_fallthru
      _
    // Predicated region
    $region14: #{tpu_custom_call.1} parent=1 // pred_check
      _
    $region15: #{tpu_custom_call.1} parent=1 // pred_check_branch
      %77 = sbr.rel (0) target = $region17
    $region16: #{tpu_custom_call.1} parent=1 // pred_region
      %79 = dma.done [#allocation4], 16
    $region17: #{tpu_custom_call.1} parent=1 // pred_fallthru
      _
    %80 = vsyncpa [#allocation3], 1
    %81 = vsyncpa [#allocation4], 1

</llo_original>
